<compile_context>
chip_gen: v7x
topology: tpu7x:2x2x1
jax: 0.10.0
libtpu: 0.0.40
codegen_flags: <defaults>
</compile_context>

<pallas_src>
import jax
import jax.numpy as jnp
from jax.experimental import pallas as pl
from jax.experimental.pallas import tpu as pltpu


LANE = 128
_VMEM_LIMIT = 48 << 20          # safe on v5e / v6e / v7x
_WORKING_SET_BUDGET = 40 << 20  # target working set (headroom under v7x 64 MiB)


def _round_up(a: int, m: int) -> int:
    return ((a + m - 1) // m) * m


def mlp_kernel(x_ref, w1_ref, b1_ref, w2_ref, b2_ref, out_ref, h_ref):
    # hidden = relu(x @ W1 + b1): MXU matmul with f32 accumulation, bias add
    # + ReLU in f32 on the VPU, single cast into the compute-dtype scratch.
    h = jnp.dot(x_ref[...], w1_ref[...], preferred_element_type=jnp.float32)
    h_ref[...] = jnp.maximum(h + b1_ref[...], 0.0).astype(h_ref.dtype)

    # predict = h @ W2 + b2 (f32 accumulation, f32 bias add).
    o = jnp.dot(h_ref[...], w2_ref[...], preferred_element_type=jnp.float32)
    out_ref[...] = (o + b2_ref[...]).astype(out_ref.dtype)


def make_net_forward(w1, b1, w2, b2, *, compute_dtype=jnp.float32, block_b=1024):
    """Pads/casts the parameters ONCE and returns forward(x)."""
    F, H = w1.shape
    O = w2.shape[1]
    Hp = _round_up(H, LANE)
    Op = _round_up(O, LANE)
    cbytes = jnp.dtype(compute_dtype).itemsize
    pack = 8 * 4 // cbytes  # sublane pack: 8 rows for f32, 16 for bf16

    def _pad2(a, rows, cols, dtype):
        r, c = a.shape
        if (r, c) != (rows, cols):
            a = jnp.pad(a, ((0, rows - r), (0, cols - c)))
        return a.astype(dtype)

    # Hoisted out of the per-call path: pad + cast parameters once.
    w1p = _pad2(w1, F, Hp, compute_dtype)
    w2p = _pad2(w2, Hp, Op, compute_dtype)
    b1p = _pad2(b1.reshape(1, -1), 1, Hp, jnp.float32)
    b2p = _pad2(b2.reshape(1, -1), 1, Op, jnp.float32)

    # Resident (single-buffered) weight/bias VMEM bytes.
    weight_bytes = (F * Hp + Hp * Op) * cbytes + (Hp + Op) * 4
    tile_budget = max(_WORKING_SET_BUDGET - weight_bytes, 1 << 20)

    @jax.jit
    def _forward(x, w1p, b1p, w2p, b2p):
        B, Fx = x.shape
        assert Fx == F, "feature dim mismatch"
        out_dtype = x.dtype
        obytes = jnp.dtype(out_dtype).itemsize

        # VMEM per batch row: double-buffered x & out tiles + h scratch row.
        per_row = 2 * (F * cbytes + Op * obytes) + Hp * cbytes
        tb_cap = max(pack, (tile_budget // per_row) // pack * pack)
        TB = max(pack, min(block_b, tb_cap) // pack * pack)

        # Choose the tile count first, then shrink TB to minimize batch
        # padding; use >= 2 tiles when B allows (v7x megacore).
        n_tiles = pl.cdiv(B, TB)
        if n_tiles == 1 and B >= 2 * pack:
            n_tiles = 2
        TB = _round_up(pl.cdiv(B, n_tiles), pack)
        Bp = n_tiles * TB

        xp = x
        if Bp != B:
            xp = jnp.pad(xp, ((0, Bp - B), (0, 0)))
        xp = xp.astype(compute_dtype)

        cost = pl.CostEstimate(
            flops=2 * Bp * (F * Hp + Hp * Op),
            transcendentals=0,
            bytes_accessed=((Bp * F + F * Hp + Hp * Op) * cbytes
                            + (Hp + Op) * 4 + Bp * Op * obytes),
        )

        resident = dict(pipeline_mode=pl.Buffered(1))  # fetched once, 1 copy
        out_padded = pl.pallas_call(
            mlp_kernel,
            out_shape=jax.ShapeDtypeStruct((Bp, Op), out_dtype),
            grid_spec=pltpu.PrefetchScalarGridSpec(
                num_scalar_prefetch=0,
                grid=(n_tiles,),
                in_specs=[
                    pl.BlockSpec((TB, F), lambda i: (i, 0)),                # x
                    pl.BlockSpec((F, Hp), lambda i: (0, 0), **resident),    # W1
                    pl.BlockSpec((1, Hp), lambda i: (0, 0), **resident),    # b1
                    pl.BlockSpec((Hp, Op), lambda i: (0, 0), **resident),   # W2
                    pl.BlockSpec((1, Op), lambda i: (0, 0), **resident),    # b2
                ],
                out_specs=pl.BlockSpec((TB, Op), lambda i: (i, 0)),
                scratch_shapes=[pltpu.VMEM((TB, Hp), compute_dtype)],
            ),
            compiler_params=pltpu.CompilerParams(
                dimension_semantics=("parallel",),
                vmem_limit_bytes=_VMEM_LIMIT,
            ),
            cost_estimate=cost,
        )(xp, w1p, b1p, w2p, b2p)
        return out_padded[:B, :O]

    return lambda x: _forward(x, w1p, b1p, w2p, b2p)


if __name__ == "__main__":
    # Small shapes consistent with Net(n_features, n_hidden, n_output)
    batch, n_features, n_hidden, n_output = 8, 32, 64, 16

    key = jax.random.PRNGKey(0)
    kx, kw1, kb1, kw2, kb2 = jax.random.split(key, 5)

    x = jax.random.normal(kx, (batch, n_features), dtype=jnp.float32)

    # Deterministic Linear-like uniform init, stored as (in, out)
    lim1 = 1.0 / jnp.sqrt(n_features)
    w1 = jax.random.uniform(kw1, (n_features, n_hidden), jnp.float32, -lim1, lim1)
    b1 = jax.random.uniform(kb1, (1, n_hidden), jnp.float32, -lim1, lim1)

    lim2 = 1.0 / jnp.sqrt(n_hidden)
    w2 = jax.random.uniform(kw2, (n_hidden, n_output), jnp.float32, -lim2, lim2)
    b2 = jax.random.uniform(kb2, (1, n_output), jnp.float32, -lim2, lim2)

    # Pure-JAX reference
    ref = jnp.maximum(x @ w1 + b1, 0.0) @ w2 + b2

    # f32 path: strict check
    fwd_f32 = make_net_forward(w1, b1, w2, b2, compute_dtype=jnp.float32)
    out_f32 = fwd_f32(x)
    jax.block_until_ready(out_f32)
    assert out_f32.shape == (batch, n_output)
    assert jnp.allclose(out_f32, ref, atol=1e-5, rtol=1e-5)

    # bf16 path (v6e/v7x MXU dtype): f32 accumulation, loose tolerance
    fwd_bf16 = make_net_forward(w1, b1, w2, b2, compute_dtype=jnp.bfloat16)
    out_bf16 = fwd_bf16(x)
    jax.block_until_ready(out_bf16)
    assert out_bf16.shape == (batch, n_output)
    assert jnp.allclose(out_bf16, ref, atol=5e-2, rtol=5e-2)

    print("KERNEL_OK")
</pallas_src>

<mosaic_0001>
module attributes {stable_mosaic.version = 11 : i64} {
  func.func @mlp_kernel(%arg0: i32, %arg1: memref<8x32xf32, #tpu.memory_space<vmem>>, %arg2: memref<32x128xf32, #tpu.memory_space<vmem>>, %arg3: memref<1x128xf32, #tpu.memory_space<vmem>>, %arg4: memref<128x128xf32, #tpu.memory_space<vmem>>, %arg5: memref<1x128xf32, #tpu.memory_space<vmem>>, %arg6: memref<8x128xf32, #tpu.memory_space<vmem>>, %arg7: memref<8x128xf32, #tpu.memory_space<vmem>>) attributes {dimension_semantics = [#tpu.dimension_semantics<parallel>], iteration_bounds = array<i64: 1>, scalar_prefetch = 0 : i64, scratch_operands = 1 : i64, tpu.core_type = #tpu.core_type<tc>, window_params = [{transform_indices = @transform_0, window_bounds = array<i64: 8, 32>}, {pipeline_mode = #tpu.pipeline_mode<synchronous>, transform_indices = @transform_1, window_bounds = array<i64: 32, 128>}, {pipeline_mode = #tpu.pipeline_mode<synchronous>, transform_indices = @transform_2, window_bounds = array<i64: 1, 128>}, {pipeline_mode = #tpu.pipeline_mode<synchronous>, transform_indices = @transform_3, window_bounds = array<i64: 128, 128>}, {pipeline_mode = #tpu.pipeline_mode<synchronous>, transform_indices = @transform_4, window_bounds = array<i64: 1, 128>}, {transform_indices = @transform_5, window_bounds = array<i64: 8, 128>}]} {
    %c0 = arith.constant 0 : index
    %c0_0 = arith.constant 0 : index
    %0 = vector.load %arg1[%c0, %c0_0] : memref<8x32xf32, #tpu.memory_space<vmem>>, vector<8x32xf32>
    %c0_1 = arith.constant 0 : index
    %c0_2 = arith.constant 0 : index
    %1 = vector.load %arg2[%c0_1, %c0_2] : memref<32x128xf32, #tpu.memory_space<vmem>>, vector<32x128xf32>
    %cst = arith.constant dense<0.000000e+00> : vector<8x128xf32>
    %2 = tpu.matmul %0, %1, %cst {dimension_numbers = #tpu.dot_dimension_numbers<[1], [0], [0], [1], [0, 0, 1, 1], [], []>} : vector<8x32xf32>, vector<32x128xf32>, vector<8x128xf32> -> vector<8x128xf32>
    %c0_3 = arith.constant 0 : index
    %c0_4 = arith.constant 0 : index
    %3 = vector.load %arg3[%c0_3, %c0_4] : memref<1x128xf32, #tpu.memory_space<vmem>>, vector<1x128xf32>
    %4 = vector.broadcast %3 : vector<1x128xf32> to vector<8x128xf32>
    %5 = arith.addf %2, %4 : vector<8x128xf32>
    %cst_5 = arith.constant 0.000000e+00 : f32
    %6 = vector.broadcast %cst_5 : f32 to vector<8x128xf32>
    %7 = arith.maximumf %5, %6 : vector<8x128xf32>
    %c0_6 = arith.constant 0 : index
    %c0_7 = arith.constant 0 : index
    %8 = vector.load %arg7[%c0_6, %c0_7] : memref<8x128xf32, #tpu.memory_space<vmem>>, vector<8x128xf32>
    tpu.vector_store %arg7[%c0_6, %c0_7], %7 {strides = array<i32>} : memref<8x128xf32, #tpu.memory_space<vmem>>, vector<8x128xf32>,
    %c0_8 = arith.constant 0 : index
    %c0_9 = arith.constant 0 : index
    %9 = vector.load %arg7[%c0_8, %c0_9] : memref<8x128xf32, #tpu.memory_space<vmem>>, vector<8x128xf32>
    %c0_10 = arith.constant 0 : index
    %c0_11 = arith.constant 0 : index
    %10 = vector.load %arg4[%c0_10, %c0_11] : memref<128x128xf32, #tpu.memory_space<vmem>>, vector<128x128xf32>
    %cst_12 = arith.constant dense<0.000000e+00> : vector<8x128xf32>
    %11 = tpu.matmul %9, %10, %cst_12 {dimension_numbers = #tpu.dot_dimension_numbers<[1], [0], [0], [1], [0, 0, 1, 1], [], []>} : vector<8x128xf32>, vector<128x128xf32>, vector<8x128xf32> -> vector<8x128xf32>
    %c0_13 = arith.constant 0 : index
    %c0_14 = arith.constant 0 : index
    %12 = vector.load %arg5[%c0_13, %c0_14] : memref<1x128xf32, #tpu.memory_space<vmem>>, vector<1x128xf32>
    %13 = vector.broadcast %12 : vector<1x128xf32> to vector<8x128xf32>
    %14 = arith.addf %11, %13 : vector<8x128xf32>
    %c0_15 = arith.constant 0 : index
    %c0_16 = arith.constant 0 : index
    %15 = vector.load %arg6[%c0_15, %c0_16] : memref<8x128xf32, #tpu.memory_space<vmem>>, vector<8x128xf32>
    tpu.vector_store %arg6[%c0_15, %c0_16], %14 {strides = array<i32>} : memref<8x128xf32, #tpu.memory_space<vmem>>, vector<8x128xf32>,
    return
  }
  func.func @transform_0(%arg0: i32) -> (i32, i32) {
    %c0_i32 = arith.constant 0 : i32
    %c0_i32_0 = arith.constant 0 : i32
    return %arg0, %c0_i32 : i32, i32
  }
  func.func @transform_1(%arg0: i32) -> (i32, i32) {
    %c0_i32 = arith.constant 0 : i32
    %c0_i32_0 = arith.constant 0 : i32
    %c0_i32_1 = arith.constant 0 : i32
    return %c0_i32, %c0_i32_0 : i32, i32
  }
  func.func @transform_2(%arg0: i32) -> (i32, i32) {
    %c0_i32 = arith.constant 0 : i32
    %c0_i32_0 = arith.constant 0 : i32
    %c0_i32_1 = arith.constant 0 : i32
    return %c0_i32, %c0_i32_0 : i32, i32
  }
  func.func @transform_3(%arg0: i32) -> (i32, i32) {
    %c0_i32 = arith.constant 0 : i32
    %c0_i32_0 = arith.constant 0 : i32
    %c0_i32_1 = arith.constant 0 : i32
    return %c0_i32, %c0_i32_0 : i32, i32
  }
  func.func @transform_4(%arg0: i32) -> (i32, i32) {
    %c0_i32 = arith.constant 0 : i32
    %c0_i32_0 = arith.constant 0 : i32
    %c0_i32_1 = arith.constant 0 : i32
    return %c0_i32, %c0_i32_0 : i32, i32
  }
  func.func @transform_5(%arg0: i32) -> (i32, i32) {
    %c0_i32 = arith.constant 0 : i32
    %c0_i32_0 = arith.constant 0 : i32
    return %arg0, %c0_i32 : i32, i32
  }
}

</mosaic_0001>

<llo_original>
// kernel: _forward.1
$region0: #{_forward.1}
  #allocation0 [shape = 'u32[]', space=smem, size = 0x4, offset = 0x4, fixed_abs, tag = 'smem constant byte address 0x4 - core index']
  #allocation1 [shape = 'u32[144,128]{1,0:T(1,128)}', space=vmem, size = 0x12000, scoped, tag = 'internal scratch']
  #allocation2 [shape = 'f32[8,128]{1,0:T(8,128)}', space=vmem, size = 0x1000, scoped, tag = 'scratch operand']
  %s0 = inlined_call_operand.hbm [shape: f32[8,32], index: 0, kind: input, shape index: {}]
  %s1 = inlined_call_operand.hbm [shape: f32[32,128], index: 1, kind: input, shape index: {}]
  %s2 = inlined_call_operand.vmem [shape: f32[1,128], index: 2, kind: input, shape index: {}]
  %s3 = inlined_call_operand.hbm [shape: f32[128,128], index: 3, kind: input, shape index: {}]
  %s4 = inlined_call_operand.vmem [shape: f32[1,128], index: 4, kind: input, shape index: {}]
  %s5 = inlined_call_operand.hbm [shape: f32[8,128], index: 5, kind: output, shape index: {}]
  %s6 = sld [smem:[#allocation0]]
  $region42: #{_forward.1} parent=0
    _
  %s8 = ssub.s32 1, %s6
  %s9 = scalar_select 0, %s8, %s6
  $region1: #{_forward.1} parent=0
    #allocation3 [shape = 'u8[4096]{0}', space=vmem, size = 0x1000, scoped, tag = 'input window, operand 0, single buffered']
    #allocation4 [shape = 's32[1]{0}', space=sflag, size = 0x4, scoped, tag = 'scoped memory for _forward.1']
    #allocation5 [shape = 's32[1]{0}', space=sflag, size = 0x4, scoped, tag = 'scoped memory for _forward.1']
    #allocation6 [shape = 'u8[16384]{0}', space=vmem, size = 0x4000, scoped, tag = 'input window, operand 1, single buffered']
    #allocation7 [shape = 's32[1]{0}', space=sflag, size = 0x4, scoped, tag = 'scoped memory for _forward.1']
    #allocation8 [shape = 'u8[65536]{0}', space=vmem, size = 0x10000, scoped, tag = 'input window, operand 3, single buffered']
    #allocation9 [shape = 'u8[4096]{0}', space=vmem, size = 0x1000, scoped, tag = 'output window, operand 0, single buffered']
    %10 = vsyncpa [#allocation4], 0
    %11 = vsyncpa [#allocation7], 0
    %12 = vsyncpa [#allocation5], 0
    // Predicated region
    $region2: #{_forward.1} parent=1 // pred_check
      _
    $region3: #{_forward.1} parent=1 // pred_check_branch
      %14 = sbr.rel (0) target = $region5
    $region4: #{_forward.1} parent=1 // pred_region
      %s16 = ssub.s32 128, 128
      %17 = vsyncadd [#allocation4], %s16
      %s19 = sshll.u32 [#allocation3], 4
      %s20 = int_to_ptr.vmem [resolvable:$true] %s19
      %22 = dma.hbm_to_vmem [thread:$0]  %s0, 128, %s20, [#allocation4]
    $region5: #{_forward.1} parent=1 // pred_fallthru
      _
    // Predicated region
    $region6: #{_forward.1} parent=1 // pred_check
      _
    $region7: #{_forward.1} parent=1 // pred_check_branch
      %24 = sbr.rel (0) target = $region9
    $region8: #{_forward.1} parent=1 // pred_region
      %s26 = ssub.s32 512, 512
      %27 = vsyncadd [#allocation7], %s26
      %s28 = sshll.u32 [#allocation6], 4
      %s29 = int_to_ptr.vmem [resolvable:$true] %s28
      %34 = dma.hbm_to_vmem [thread:$0]  %s1, 512, %s29, [#allocation7], 128, 128, 8
    $region9: #{_forward.1} parent=1 // pred_fallthru
      _
    // Predicated region
    $region10: #{_forward.1} parent=1 // pred_check
      _
    $region11: #{_forward.1} parent=1 // pred_check_branch
      %36 = sbr.rel (0) target = $region13
    $region12: #{_forward.1} parent=1 // pred_region
      _
    $region13: #{_forward.1} parent=1 // pred_fallthru
      _
    // Predicated region
    $region14: #{_forward.1} parent=1 // pred_check
      _
    $region15: #{_forward.1} parent=1 // pred_check_branch
      %38 = sbr.rel (0) target = $region17
    $region16: #{_forward.1} parent=1 // pred_region
      %s40 = ssub.s32 2048, 2048
      %41 = vsyncadd [#allocation7], %s40
      %s42 = sshll.u32 [#allocation8], 4
      %s43 = int_to_ptr.vmem [resolvable:$true] %s42
      %48 = dma.hbm_to_vmem [thread:$0]  %s3, 2048, %s43, [#allocation7], 128, 128, 8
    $region17: #{_forward.1} parent=1 // pred_fallthru
      _
    // Predicated region
    $region18: #{_forward.1} parent=1 // pred_check
      _
    $region19: #{_forward.1} parent=1 // pred_check_branch
      %50 = sbr.rel (0) target = $region21
    $region20: #{_forward.1} parent=1 // pred_region
      _
    $region21: #{_forward.1} parent=1 // pred_fallthru
      _
    // Predicated region
    $region22: #{_forward.1} parent=1 // pred_check
      _
    $region23: #{_forward.1} parent=1 // pred_check_branch
      %52 = sbr.rel (0) target = $region25
    $region24: #{_forward.1} parent=1 // pred_region
      %53 = dma.done [#allocation4], 128
    $region25: #{_forward.1} parent=1 // pred_fallthru
      _
    // Predicated region
    $region26: #{_forward.1} parent=1 // pred_check
      _
    $region27: #{_forward.1} parent=1 // pred_check_branch
      %55 = sbr.rel (0) target = $region29
    $region28: #{_forward.1} parent=1 // pred_region
      %56 = dma.done [#allocation7], 512
    $region29: #{_forward.1} parent=1 // pred_fallthru
      _
    // Predicated region
    $region30: #{_forward.1} parent=1 // pred_check
      _
    $region31: #{_forward.1} parent=1 // pred_check_branch
      %58 = sbr.rel (0) target = $region33
    $region32: #{_forward.1} parent=1 // pred_region
      %59 = dma.done [#allocation7], 2048
    $region33: #{_forward.1} parent=1 // pred_fallthru
      _
    %v60 = vld [vmem:[#allocation3] sm:$0xff]
    %v61 = vld [vmem:[#allocation6] sm:$0xff]
    %v62 = vld [vmem:[#allocation6 + $0x8] sm:$0xff]
    %v63 = vld [vmem:[#allocation6 + $0x10] sm:$0xff]
    %v64 = vld [vmem:[#allocation6 + $0x18] sm:$0xff]
    %v65 = vld [vmem:[%s2] sm:$0x1]
    %v67 = vlaneseq
    %v68 = vshrl.u32 %v67, 7
    %v69 = vsub.s32 0, %v68
    %v70 = vrot.slane %v65, %v69
    %vm72 = vcmask 261120
    %v74 = vsel %vm72, %v60, 0
    %76 = vmatprep.subr.mxu0 0.0
    %77 = vmatpush1.msra.mxu0 %v61
    %78 = vmatprep.subr.mxu0 0.0
    %79 = vmatpush1.msra.mxu0 %v62
    %80 = vmatprep.subr.mxu0 0.0
    %81 = vmatpush1.msra.mxu0 %v63
    %82 = vmatprep.subr.mxu0 0.0
    %83 = vmatpush1.msra.mxu0 %v64
    %84 = vmatprep.subr.mxu0 0.0
    %85 = vmatpush1.msra.mxu0 0.0
    %86 = vmatprep.subr.mxu0 0.0
    %87 = vmatpush1.msra.mxu0 0.0
    %88 = vmatprep.subr.mxu0 0.0
    %89 = vmatpush1.msra.mxu0 0.0
    %90 = vmatprep.subr.mxu0 0.0
    %91 = vmatpush1.msra.mxu0 0.0
    %92 = vmatprep.subr.mxu0 0.0
    %93 = vmatpush1.msra.mxu0 0.0
    %94 = vmatprep.subr.mxu0 0.0
    %95 = vmatpush1.msra.mxu0 0.0
    %96 = vmatprep.subr.mxu0 0.0
    %97 = vmatpush1.msra.mxu0 0.0
    %98 = vmatprep.subr.mxu0 0.0
    %99 = vmatpush1.msra.mxu0 0.0
    %100 = vmatprep.subr.mxu0 0.0
    %101 = vmatpush1.msra.mxu0 0.0
    %102 = vmatprep.subr.mxu0 0.0
    %103 = vmatpush1.msra.mxu0 0.0
    %104 = vmatprep.subr.mxu0 0.0
    %105 = vmatpush1.msra.mxu0 0.0
    %106 = vmatprep.subr.mxu0 0.0
    %107 = vmatpush1.msra.mxu0 0.0
    %108 = vmatprep.subr.mxu0 0.0
    %109 = vmatpush1.msra.mxu0 0.0
    %110 = vmatprep.subr.mxu0 0.0
    %111 = vmatpush1.msra.mxu0 0.0
    %112 = vmatprep.subr.mxu0 0.0
    %113 = vmatpush1.msra.mxu0 0.0
    %114 = vmatprep.subr.mxu0 0.0
    %115 = vmatpush1.msra.mxu0 0.0
    %116 = vmatprep.subr.mxu0 0.0
    %117 = vmatpush1.msra.mxu0 0.0
    %118 = vmatprep.subr.mxu0 0.0
    %119 = vmatpush1.msra.mxu0 0.0
    %120 = vmatprep.subr.mxu0 0.0
    %121 = vmatpush1.msra.mxu0 0.0
    %122 = vmatprep.subr.mxu0 0.0
    %123 = vmatpush1.msra.mxu0 0.0
    %124 = vmatprep.subr.mxu0 0.0
    %125 = vmatpush1.msra.mxu0 0.0
    %126 = vmatprep.subr.mxu0 0.0
    %127 = vmatpush1.msra.mxu0 0.0
    %128 = vmatprep.subr.mxu0 0.0
    %129 = vmatpush1.msra.mxu0 0.0
    %130 = vmatprep.subr.mxu0 0.0
    %131 = vmatpush1.msra.mxu0 0.0
    %132 = vmatprep.subr.mxu0 0.0
    %133 = vmatpush1.msra.mxu0 0.0
    %134 = vmatprep.subr.mxu0 0.0
    %135 = vmatpush1.msra.mxu0 0.0
    %136 = vmatprep.subr.mxu0 0.0
    %137 = vmatpush1.msra.mxu0 0.0
    %138 = vmatprep.subr.mxu0 0.0
    %139 = vmatpush1.msra.mxu0 0.0
    %140 = vmatprep.mubr.f32.mxu0 0.0
    %141 = vmatmul.mubr.f32.gmra.mrb[0].mxu0 %v74
    %v142 = vpop.f32.mrb[0].mxu0
    %v143 = vadd.f32 %v70, %v142
    %v144 = vpop.f32.mrb[0].mxu0
    %145 = vdwg.mxu0
    %v146 = vmax.f32 %v143, 0.0
    %147 = vst [vmem:[#allocation2] sm:$0xff] %v146
    %v148 = vld [vmem:[#allocation2] sm:$0xff]
    %v149 = vld [vmem:[#allocation8] sm:$0xff]
    %v150 = vld [vmem:[#allocation8 + $0x8] sm:$0xff]
    %v151 = vld [vmem:[#allocation8 + $0x10] sm:$0xff]
    %v152 = vld [vmem:[#allocation8 + $0x18] sm:$0xff]
    %v153 = vld [vmem:[#allocation8 + $0x20] sm:$0xff]
    %v154 = vld [vmem:[#allocation8 + $0x28] sm:$0xff]
    %v155 = vld [vmem:[#allocation8 + $0x30] sm:$0xff]
    %v156 = vld [vmem:[#allocation8 + $0x38] sm:$0xff]
    %v157 = vld [vmem:[#allocation8 + $0x40] sm:$0xff]
    %v158 = vld [vmem:[#allocation8 + $0x48] sm:$0xff]
    %v159 = vld [vmem:[#allocation8 + $0x50] sm:$0xff]
    %v160 = vld [vmem:[#allocation8 + $0x58] sm:$0xff]
    %v161 = vld [vmem:[#allocation8 + $0x60] sm:$0xff]
    %v162 = vld [vmem:[#allocation8 + $0x68] sm:$0xff]
    %v163 = vld [vmem:[#allocation8 + $0x70] sm:$0xff]
    %v164 = vld [vmem:[#allocation8 + $0x78] sm:$0xff]
    %v165 = vld [vmem:[%s4] sm:$0x1]
    %v167 = vlaneseq
    %v168 = vshrl.u32 %v167, 7
    %v169 = vsub.s32 0, %v168
    %v170 = vrot.slane %v165, %v169
    %172 = vmatprep.subr.mxu0 0.0
    %173 = vmatpush1.msra.mxu0 %v149
    %174 = vmatprep.subr.mxu0 0.0
    %175 = vmatpush1.msra.mxu0 %v150
    %176 = vmatprep.subr.mxu0 0.0
    %177 = vmatpush1.msra.mxu0 %v151
    %178 = vmatprep.subr.mxu0 0.0
    %179 = vmatpush1.msra.mxu0 %v152
    %180 = vmatprep.subr.mxu0 0.0
    %181 = vmatpush1.msra.mxu0 %v153
    %182 = vmatprep.subr.mxu0 0.0
    %183 = vmatpush1.msra.mxu0 %v154
    %184 = vmatprep.subr.mxu0 0.0
    %185 = vmatpush1.msra.mxu0 %v155
    %186 = vmatprep.subr.mxu0 0.0
    %187 = vmatpush1.msra.mxu0 %v156
    %188 = vmatprep.subr.mxu0 0.0
    %189 = vmatpush1.msra.mxu0 %v157
    %190 = vmatprep.subr.mxu0 0.0
    %191 = vmatpush1.msra.mxu0 %v158
    %192 = vmatprep.subr.mxu0 0.0
    %193 = vmatpush1.msra.mxu0 %v159
    %194 = vmatprep.subr.mxu0 0.0
    %195 = vmatpush1.msra.mxu0 %v160
    %196 = vmatprep.subr.mxu0 0.0
    %197 = vmatpush1.msra.mxu0 %v161
    %198 = vmatprep.subr.mxu0 0.0
    %199 = vmatpush1.msra.mxu0 %v162
    %200 = vmatprep.subr.mxu0 0.0
    %201 = vmatpush1.msra.mxu0 %v163
    %202 = vmatprep.subr.mxu0 0.0
    %203 = vmatpush1.msra.mxu0 %v164
    %204 = vmatprep.subr.mxu0 0.0
    %205 = vmatpush1.msra.mxu0 0.0
    %206 = vmatprep.subr.mxu0 0.0
    %207 = vmatpush1.msra.mxu0 0.0
    %208 = vmatprep.subr.mxu0 0.0
    %209 = vmatpush1.msra.mxu0 0.0
    %210 = vmatprep.subr.mxu0 0.0
    %211 = vmatpush1.msra.mxu0 0.0
    %212 = vmatprep.subr.mxu0 0.0
    %213 = vmatpush1.msra.mxu0 0.0
    %214 = vmatprep.subr.mxu0 0.0
    %215 = vmatpush1.msra.mxu0 0.0
    %216 = vmatprep.subr.mxu0 0.0
    %217 = vmatpush1.msra.mxu0 0.0
    %218 = vmatprep.subr.mxu0 0.0
    %219 = vmatpush1.msra.mxu0 0.0
    %220 = vmatprep.subr.mxu0 0.0
    %221 = vmatpush1.msra.mxu0 0.0
    %222 = vmatprep.subr.mxu0 0.0
    %223 = vmatpush1.msra.mxu0 0.0
    %224 = vmatprep.subr.mxu0 0.0
    %225 = vmatpush1.msra.mxu0 0.0
    %226 = vmatprep.subr.mxu0 0.0
    %227 = vmatpush1.msra.mxu0 0.0
    %228 = vmatprep.subr.mxu0 0.0
    %229 = vmatpush1.msra.mxu0 0.0
    %230 = vmatprep.subr.mxu0 0.0
    %231 = vmatpush1.msra.mxu0 0.0
    %232 = vmatprep.subr.mxu0 0.0
    %233 = vmatpush1.msra.mxu0 0.0
    %234 = vmatprep.subr.mxu0 0.0
    %235 = vmatpush1.msra.mxu0 0.0
    %236 = vmatprep.mubr.f32.mxu0 0.0
    %237 = vmatmul.mubr.f32.gmra.mrb[0].mxu0 %v148
    %v238 = vpop.f32.mrb[0].mxu0
    %v239 = vadd.f32 %v170, %v238
    %v240 = vpop.f32.mrb[0].mxu0
    %241 = vdwg.mxu0
    %242 = vst [vmem:[#allocation9] sm:$0xff] %v239
    // Predicated region
    $region34: #{_forward.1} parent=1 // pred_check
      _
    $region35: #{_forward.1} parent=1 // pred_check_branch
      %244 = sbr.rel (0) target = $region37
    $region36: #{_forward.1} parent=1 // pred_region
      %s246 = ssub.s32 128, 128
      %247 = vsyncadd [#allocation5], %s246
      %s249 = sshll.u32 [#allocation9], 4
      %s250 = int_to_ptr.vmem [resolvable:$true] %s249
      %252 = dma.vmem_to_hbm [thread:$0]  %s250, 128, %s5, [#allocation5]
    $region37: #{_forward.1} parent=1 // pred_fallthru
      _
    // Predicated region
    $region38: #{_forward.1} parent=1 // pred_check
      _
    $region39: #{_forward.1} parent=1 // pred_check_branch
      %254 = sbr.rel (0) target = $region41
    $region40: #{_forward.1} parent=1 // pred_region
      %255 = dma.done [#allocation5], 128
    $region41: #{_forward.1} parent=1 // pred_fallthru
      _
    %256 = vsyncpa [#allocation4], 1
    %257 = vsyncpa [#allocation7], 1
    %258 = vsyncpa [#allocation5], 1

</llo_original>
